<compile_context>
chip_gen: v6e
topology: v6e:2x2x1
jax: 0.10.0
libtpu: 0.0.40
codegen_flags: <defaults>
</compile_context>

<pallas_src>
import functools

import jax
import jax.numpy as jnp
from jax.experimental import pallas as pl
from jax.experimental.pallas import tpu as pltpu

MARGIN = 1.0       # TripletMarginLoss default margin
NORM_EPS = 1e-12   # F.normalize default eps
DIST_EPS = 1e-6    # TripletMarginLoss / pairwise_distance default eps


def _cls_cl_loss_kernel(feat_ref, p_hi_ref, p_lo_ref, tp_ref, lab_ref, out_ref,
                        *, true_b, tile_b, c_pad):
    i = pl.program_id(0)
    d = feat_ref.shape[1]

    # ---- Row-normalize the feature tile (F.normalize(x, p=2, dim=1)). ----
    x = feat_ref[...].astype(jnp.float32)                         # (TILE_B, D)
    nrm = jnp.sqrt(jnp.sum(x * x, axis=1, keepdims=True))
    a = x * pl.reciprocal(jnp.maximum(nrm, NORM_EPS))             # exact reciprocal

    # ---- Row constants of the expanded squared distance. ----
    # ||a - p + e||^2 = [||a||^2 + 2e*sum(a) + D*e^2] + [||p||^2 - 2e*sum(p)] - 2 a.p
    base = (jnp.sum(a * a + (2.0 * DIST_EPS) * a, axis=1, keepdims=True)
            + jnp.float32(d) * jnp.float32(DIST_EPS) * jnp.float32(DIST_EPS))

    # ---- Similarity matrix on the MXU: 3 native bf16 passes, ~f32 accurate. ----
    a_hi = a.astype(jnp.bfloat16)
    a_lo = (a - a_hi.astype(jnp.float32)).astype(jnp.bfloat16)
    p_hi = p_hi_ref[...]                                          # (D, C_pad) bf16, resident
    p_lo = p_lo_ref[...]                                          # (D, C_pad) bf16, resident
    s = (jnp.dot(a_hi, p_hi, preferred_element_type=jnp.float32)
         + jnp.dot(a_hi, p_lo, preferred_element_type=jnp.float32)
         + jnp.dot(a_lo, p_hi, preferred_element_type=jnp.float32))  # (TILE_B, C_pad)

    g = tp_ref[...] - 2.0 * s            # per-class constant folded into the similarity

    # ---- Select pos/neg entries with one-hot masks (VPU select + lane reduce). ----
    class_ids = jax.lax.broadcasted_iota(jnp.int32, (tile_b, c_pad), 1)
    pos_mask = class_ids == lab_ref[:, 0:1]
    neg_mask = class_ids == lab_ref[:, 1:2]
    d2_ap = base + jnp.sum(jnp.where(pos_mask, g, 0.0), axis=1, keepdims=True)
    d2_an = base + jnp.sum(jnp.where(neg_mask, g, 0.0), axis=1, keepdims=True)

    # Clamp tiny negative rounding residue before sqrt (a ~= p gives d^2 ~ D*e^2).
    d_ap = jnp.sqrt(jnp.maximum(d2_ap, 0.0))
    d_an = jnp.sqrt(jnp.maximum(d2_an, 0.0))
    per_sample = jnp.maximum(d_ap - d_an + MARGIN, 0.0)           # (TILE_B, 1)

    # Padded rows of the last partial tile hold unspecified VMEM data and may carry
    # NaN/Inf through the sqrt; the select below is a lane-wise select, so those
    # lanes are discarded entirely before the reduction.
    row_ids = i * tile_b + jax.lax.broadcasted_iota(jnp.int32, (tile_b, 1), 0)
    per_sample = jnp.where(row_ids < true_b, per_sample, 0.0)

    tile_sum = jnp.sum(per_sample)
    out_ref[...] = jnp.broadcast_to(tile_sum, (1, 1, 128))        # lane-aligned partial


def _vmem_capacity_bytes():
    try:
        return int(pltpu.get_tpu_info().vmem_capacity_bytes)
    except Exception:
        return 64 * 1024 * 1024      # conservative (v7x-sized) fallback


def _pick_tile_b(batch, feat_dim, c_pad, itemsize):
    # Per-generation VMEM budget; the streamed feature tile (double-buffered) plus
    # its in-kernel f32 / hi / lo copies and the (tile, c_pad) similarity temporaries
    # dominate.  Resident proxy blocks and label/output blocks are tiny.
    vmem_cap = _vmem_capacity_bytes()
    budget = min(vmem_cap // 2, 24 * 1024 * 1024)
    per_row = (2 * feat_dim * max(int(itemsize), 1)   # double-buffered HBM stream
               + feat_dim * (4 + 2 + 2)               # in-kernel f32 + bf16 hi/lo copies
               + c_pad * 12                           # similarity + select temporaries
               + 64)
    rows = budget // per_row
    rows = max(8, (rows // 8) * 8)
    tile = min(2048, rows)
    if tile >= batch:
        return batch                 # single full tile; any batch size is legal
    return tile                      # multiple of 8; last partial tile is masked


def cls_cl_loss(feature, gt_label, proxy, perm_key, *, tile_b=None):
    """feature: (B, D), gt_label: (B,) int, proxy: (C, D) -> scalar f32 loss."""
    B, D = feature.shape
    C, Dp = proxy.shape
    assert D == Dp

    gt_label = gt_label.astype(jnp.int32)
    # TODO(synk): torch.randperm is stateful/stochastic; replaced by a deterministic
    # jax.random.permutation driven by an explicit PRNG key.
    perm = jax.random.permutation(perm_key, B)
    # neg_pred = pos_pred[perm] == proxy[gt_label[perm]] (gather commutes with the
    # row-wise normalization), so only the permuted labels go to the kernel.
    neg_label = gt_label[perm]
    labels = jnp.stack([gt_label, neg_label], axis=1)             # (B, 2) int32

    # ---- Hoisted proxy preparation (runs once in XLA; stays VMEM-resident). ----
    proxy_f32 = proxy.astype(jnp.float32)
    p_nrm = jnp.sqrt(jnp.sum(proxy_f32 * proxy_f32, axis=1, keepdims=True))
    proxy_n = proxy_f32 / jnp.maximum(p_nrm, NORM_EPS)            # (C, D)

    c_pad = max(128, ((C + 127) // 128) * 128)                    # lane-aligned classes
    if c_pad != C:
        proxy_n = jnp.pad(proxy_n, ((0, c_pad - C), (0, 0)))
    proxy_hi = proxy_n.astype(jnp.bfloat16)
    proxy_lo = (proxy_n - proxy_hi.astype(jnp.float32)).astype(jnp.bfloat16)
    p_hi_t = proxy_hi.T                                           # (D, c_pad) bf16
    p_lo_t = proxy_lo.T                                           # (D, c_pad) bf16
    t_p = (jnp.sum(proxy_n * proxy_n, axis=1)
           - (2.0 * DIST_EPS) * jnp.sum(proxy_n, axis=1)
           ).reshape(1, c_pad).astype(jnp.float32)                # ||p||^2 - 2e*sum(p)

    if tile_b is None:
        tile_b = _pick_tile_b(B, D, c_pad, feature.dtype.itemsize)
    else:
        tile_b = min(int(tile_b), B)
        if tile_b < B and tile_b % 8 != 0:
            tile_b = max(8, (tile_b // 8) * 8)
    num_tiles = pl.cdiv(B, tile_b)

    kernel = functools.partial(
        _cls_cl_loss_kernel, true_b=B, tile_b=tile_b, c_pad=c_pad)

    vmem_cap = _vmem_capacity_bytes()
    vmem_limit = int(min(vmem_cap * 3 // 4, 96 * 1024 * 1024))

    cost = pl.CostEstimate(
        flops=int(B * (6 * c_pad * D + 8 * D + 10 * c_pad)),
        transcendentals=int(4 * B),
        bytes_accessed=int(B * D * feature.dtype.itemsize + 8 * B
                           + 4 * D * c_pad + 4 * c_pad + 512 * num_tiles),
    )

    partials = pl.pallas_call(
        kernel,
        out_shape=jax.ShapeDtypeStruct((num_tiles, 1, 128), jnp.float32),
        grid_spec=pltpu.PrefetchScalarGridSpec(
            num_scalar_prefetch=0,
            grid=(num_tiles,),
            in_specs=[
                pl.BlockSpec((tile_b, D), lambda i: (i, 0)),      # feature (streamed)
                pl.BlockSpec((D, c_pad), lambda i: (0, 0)),       # proxy hi (resident)
                pl.BlockSpec((D, c_pad), lambda i: (0, 0)),       # proxy lo (resident)
                pl.BlockSpec((1, c_pad), lambda i: (0, 0)),       # per-class constant
                pl.BlockSpec((tile_b, 2), lambda i: (i, 0)),      # pos|neg labels
            ],
            out_specs=pl.BlockSpec((1, 1, 128), lambda i: (i, 0, 0)),
        ),
        compiler_params=pltpu.CompilerParams(
            # Tiles are fully independent -> both TensorCores on v7x.
            dimension_semantics=("parallel",),
            vmem_limit_bytes=vmem_limit),
        cost_estimate=cost,
    )(feature, p_hi_t, p_lo_t, t_p, labels)

    # Final reduction over the (small) per-tile partials + mean over the true B.
    return jnp.sum(partials[:, 0, 0]) / jnp.float32(B)


def _reference(feature, gt_label, proxy, perm_key):
    # Pure-JAX reference mirroring the PyTorch module.
    def l2n(x):
        return x / jnp.maximum(jnp.linalg.norm(x, axis=1, keepdims=True), NORM_EPS)
    f = l2n(feature.astype(jnp.float32))
    pr = l2n(proxy.astype(jnp.float32))
    pos = pr[gt_label]
    perm = jax.random.permutation(perm_key, feature.shape[0])
    neg = pos[perm]
    d_ap = jnp.sqrt(jnp.sum((f - pos + DIST_EPS) ** 2, axis=1))
    d_an = jnp.sqrt(jnp.sum((f - neg + DIST_EPS) ** 2, axis=1))
    return jnp.mean(jnp.maximum(d_ap - d_an + MARGIN, 0.0))


if __name__ == "__main__":
    # Small shapes; tile_b=8 forces a multi-step grid (3 tiles) with a masked
    # partial last tile to exercise the pipelined / partial-sum path.
    B, D, num_classes = 20, 128, 4
    key = jax.random.PRNGKey(0)
    k_feat, k_proxy, k_label, k_perm = jax.random.split(key, 4)

    feature = jax.random.normal(k_feat, (B, D), dtype=jnp.float32)
    proxy = jax.random.normal(k_proxy, (num_classes, D), dtype=jnp.float32)
    gt_label = jax.random.randint(k_label, (B,), 0, num_classes, dtype=jnp.int32)

    loss = cls_cl_loss(feature, gt_label, proxy, k_perm, tile_b=8)
    jax.block_until_ready(loss)

    ref = _reference(feature, gt_label, proxy, k_perm)
    assert jnp.allclose(loss, ref, atol=1e-5, rtol=1e-5), (loss, ref)

    print("KERNEL_OK")
</pallas_src>

<mosaic_0001>
module attributes {stable_mosaic.version = 11 : i64} {
  func.func @_cls_cl_loss_kernel(%arg0: i32, %arg1: memref<8x128xf32, #tpu.memory_space<vmem>>, %arg2: memref<128x128xbf16, #tpu.memory_space<vmem>>, %arg3: memref<128x128xbf16, #tpu.memory_space<vmem>>, %arg4: memref<1x128xf32, #tpu.memory_space<vmem>>, %arg5: memref<8x2xi32, #tpu.memory_space<vmem>>, %arg6: memref<1x1x128xf32, #tpu.memory_space<vmem>>) attributes {dimension_semantics = [#tpu.dimension_semantics<parallel>], iteration_bounds = array<i64: 3>, scalar_prefetch = 0 : i64, scratch_operands = 0 : i64, tpu.core_type = #tpu.core_type<tc>, window_params = [{transform_indices = @transform_0, window_bounds = array<i64: 8, 128>}, {pipeline_mode = #tpu.pipeline_mode<synchronous>, transform_indices = @transform_1, window_bounds = array<i64: 128, 128>}, {pipeline_mode = #tpu.pipeline_mode<synchronous>, transform_indices = @transform_2, window_bounds = array<i64: 128, 128>}, {pipeline_mode = #tpu.pipeline_mode<synchronous>, transform_indices = @transform_3, window_bounds = array<i64: 1, 128>}, {transform_indices = @transform_4, window_bounds = array<i64: 8, 2>}, {transform_indices = @transform_5, window_bounds = array<i64: 1, 1, 128>}]} {
    %c0 = arith.constant 0 : index
    %c0_0 = arith.constant 0 : index
    %0 = vector.load %arg1[%c0, %c0_0] : memref<8x128xf32, #tpu.memory_space<vmem>>, vector<8x128xf32>
    %1 = arith.mulf %0, %0 : vector<8x128xf32>
    %cst = arith.constant dense<0.000000e+00> : vector<8xf32>
    %2 = vector.multi_reduction <add>, %1, %cst [1] : vector<8x128xf32> to vector<8xf32>
    %3 = vector.shape_cast %2 : vector<8xf32> to vector<8x1xf32>
    %4 = math.sqrt %3 : vector<8x1xf32>
    %cst_1 = arith.constant 9.99999996E-13 : f32
    %5 = vector.broadcast %cst_1 : f32 to vector<8x1xf32>
    %6 = arith.maximumf %4, %5 : vector<8x1xf32>
    %7 = tpu.reciprocal %6 : vector<8x1xf32> -> vector<8x1xf32>
    %8 = vector.broadcast %7 : vector<8x1xf32> to vector<8x128xf32>
    %9 = arith.mulf %0, %8 : vector<8x128xf32>
    %10 = arith.mulf %9, %9 : vector<8x128xf32>
    %cst_2 = arith.constant 2.000000e-06 : f32
    %11 = vector.broadcast %cst_2 : f32 to vector<8x128xf32>
    %12 = arith.mulf %11, %9 : vector<8x128xf32>
    %13 = arith.addf %10, %12 : vector<8x128xf32>
    %cst_3 = arith.constant dense<0.000000e+00> : vector<8xf32>
    %14 = vector.multi_reduction <add>, %13, %cst_3 [1] : vector<8x128xf32> to vector<8xf32>
    %15 = vector.shape_cast %14 : vector<8xf32> to vector<8x1xf32>
    %cst_4 = arith.constant 1.280000e+02 : f32
    %cst_5 = arith.constant 9.99999997E-7 : f32
    %16 = arith.mulf %cst_4, %cst_5 : f32
    %cst_6 = arith.constant 9.99999997E-7 : f32
    %17 = arith.mulf %16, %cst_6 : f32
    %18 = vector.broadcast %17 : f32 to vector<8x1xf32>
    %19 = arith.addf %15, %18 : vector<8x1xf32>
    %20 = arith.truncf %9 : vector<8x128xf32> to vector<8x128xbf16>
    %21 = arith.extf %20 : vector<8x128xbf16> to vector<8x128xf32>
    %22 = arith.subf %9, %21 : vector<8x128xf32>
    %23 = arith.truncf %22 : vector<8x128xf32> to vector<8x128xbf16>
    %c0_7 = arith.constant 0 : index
    %c0_8 = arith.constant 0 : index
    %24 = vector.load %arg2[%c0_7, %c0_8] : memref<128x128xbf16, #tpu.memory_space<vmem>>, vector<128x128xbf16>
    %c0_9 = arith.constant 0 : index
    %c0_10 = arith.constant 0 : index
    %25 = vector.load %arg3[%c0_9, %c0_10] : memref<128x128xbf16, #tpu.memory_space<vmem>>, vector<128x128xbf16>
    %cst_11 = arith.constant dense<0.000000e+00> : vector<8x128xf32>
    %26 = tpu.matmul %20, %24, %cst_11 {dimension_numbers = #tpu.dot_dimension_numbers<[1], [0], [0], [1], [0, 0, 1, 1], [], []>} : vector<8x128xbf16>, vector<128x128xbf16>, vector<8x128xf32> -> vector<8x128xf32>
    %cst_12 = arith.constant dense<0.000000e+00> : vector<8x128xf32>
    %27 = tpu.matmul %20, %25, %cst_12 {dimension_numbers = #tpu.dot_dimension_numbers<[1], [0], [0], [1], [0, 0, 1, 1], [], []>} : vector<8x128xbf16>, vector<128x128xbf16>, vector<8x128xf32> -> vector<8x128xf32>
    %28 = arith.addf %26, %27 : vector<8x128xf32>
    %cst_13 = arith.constant dense<0.000000e+00> : vector<8x128xf32>
    %29 = tpu.matmul %23, %24, %cst_13 {dimension_numbers = #tpu.dot_dimension_numbers<[1], [0], [0], [1], [0, 0, 1, 1], [], []>} : vector<8x128xbf16>, vector<128x128xbf16>, vector<8x128xf32> -> vector<8x128xf32>
    %30 = arith.addf %28, %29 : vector<8x128xf32>
    %c0_14 = arith.constant 0 : index
    %c0_15 = arith.constant 0 : index
    %31 = vector.load %arg4[%c0_14, %c0_15] : memref<1x128xf32, #tpu.memory_space<vmem>>, vector<1x128xf32>
    %cst_16 = arith.constant 2.000000e+00 : f32
    %32 = vector.broadcast %cst_16 : f32 to vector<8x128xf32>
    %33 = arith.mulf %32, %30 : vector<8x128xf32>
    %34 = vector.broadcast %31 : vector<1x128xf32> to vector<8x128xf32>
    %35 = arith.subf %34, %33 : vector<8x128xf32>
    %36 = tpu.iota {dimensions = array<i32: 1>} : vector<8x128xi32>
    %c0_17 = arith.constant 0 : index
    %c0_18 = arith.constant 0 : index
    %37 = vector.load %arg5[%c0_17, %c0_18] : memref<8x2xi32, #tpu.memory_space<vmem>>, vector<8x1xi32>
    %38 = vector.broadcast %37 : vector<8x1xi32> to vector<8x128xi32>
    %39 = arith.cmpi eq, %36, %38 : vector<8x128xi32>
    %c0_19 = arith.constant 0 : index
    %c1 = arith.constant 1 : index
    %40 = vector.load %arg5[%c0_19, %c1] : memref<8x2xi32, #tpu.memory_space<vmem>>, vector<8x1xi32>
    %41 = vector.broadcast %40 : vector<8x1xi32> to vector<8x128xi32>
    %42 = arith.cmpi eq, %36, %41 : vector<8x128xi32>
    %cst_20 = arith.constant 0.000000e+00 : f32
    %43 = vector.broadcast %cst_20 : f32 to vector<8x128xf32>
    %44 = arith.select %39, %35, %43 : vector<8x128xi1>, vector<8x128xf32>
    %cst_21 = arith.constant dense<0.000000e+00> : vector<8xf32>
    %45 = vector.multi_reduction <add>, %44, %cst_21 [1] : vector<8x128xf32> to vector<8xf32>
    %46 = vector.shape_cast %45 : vector<8xf32> to vector<8x1xf32>
    %47 = arith.addf %19, %46 : vector<8x1xf32>
    %cst_22 = arith.constant 0.000000e+00 : f32
    %48 = vector.broadcast %cst_22 : f32 to vector<8x128xf32>
    %49 = arith.select %42, %35, %48 : vector<8x128xi1>, vector<8x128xf32>
    %cst_23 = arith.constant dense<0.000000e+00> : vector<8xf32>
    %50 = vector.multi_reduction <add>, %49, %cst_23 [1] : vector<8x128xf32> to vector<8xf32>
    %51 = vector.shape_cast %50 : vector<8xf32> to vector<8x1xf32>
    %52 = arith.addf %19, %51 : vector<8x1xf32>
    %cst_24 = arith.constant 0.000000e+00 : f32
    %53 = vector.broadcast %cst_24 : f32 to vector<8x1xf32>
    %54 = arith.maximumf %47, %53 : vector<8x1xf32>
    %55 = math.sqrt %54 : vector<8x1xf32>
    %cst_25 = arith.constant 0.000000e+00 : f32
    %56 = vector.broadcast %cst_25 : f32 to vector<8x1xf32>
    %57 = arith.maximumf %52, %56 : vector<8x1xf32>
    %58 = math.sqrt %57 : vector<8x1xf32>
    %59 = arith.subf %55, %58 : vector<8x1xf32>
    %cst_26 = arith.constant 1.000000e+00 : f32
    %60 = vector.broadcast %cst_26 : f32 to vector<8x1xf32>
    %61 = arith.addf %59, %60 : vector<8x1xf32>
    %cst_27 = arith.constant 0.000000e+00 : f32
    %62 = vector.broadcast %cst_27 : f32 to vector<8x1xf32>
    %63 = arith.maximumf %61, %62 : vector<8x1xf32>
    %c8_i32 = arith.constant 8 : i32
    %64 = arith.muli %arg0, %c8_i32 : i32
    %65 = tpu.iota {dimensions = array<i32: 0>} : vector<8x1xi32>
    %66 = vector.broadcast %64 : i32 to vector<8x1xi32>
    %67 = arith.addi %66, %65 : vector<8x1xi32>
    %c20_i32 = arith.constant 20 : i32
    %68 = vector.broadcast %c20_i32 : i32 to vector<8x1xi32>
    %69 = arith.cmpi slt, %67, %68 : vector<8x1xi32>
    %cst_28 = arith.constant 0.000000e+00 : f32
    %70 = vector.broadcast %cst_28 : f32 to vector<8x1xf32>
    %71 = arith.select %69, %63, %70 : vector<8x1xi1>, vector<8x1xf32>
    %72 = vector.shape_cast %71 : vector<8x1xf32> to vector<1x8x1xf32>
    %cst_29 = arith.constant dense<0.000000e+00> : vector<1xf32>
    %73 = vector.multi_reduction <add>, %72, %cst_29 [1, 2] : vector<1x8x1xf32> to vector<1xf32>
    %74 = vector.shape_cast %73 : vector<1xf32> to vector<1x1x1xf32>
    %75 = vector.extract %74[0, 0, 0] : f32 from vector<1x1x1xf32>
    %76 = vector.broadcast %75 : f32 to vector<1x1x128xf32>
    %c0_30 = arith.constant 0 : index
    %c0_31 = arith.constant 0 : index
    %c0_32 = arith.constant 0 : index
    %77 = vector.load %arg6[%c0_30, %c0_31, %c0_32] : memref<1x1x128xf32, #tpu.memory_space<vmem>>, vector<1x1x128xf32>
    tpu.vector_store %arg6[%c0_30, %c0_31, %c0_32], %76 {strides = array<i32>} : memref<1x1x128xf32, #tpu.memory_space<vmem>>, vector<1x1x128xf32>,
    return
  }
  func.func @transform_0(%arg0: i32) -> (i32, i32) {
    %c0_i32 = arith.constant 0 : i32
    %c0_i32_0 = arith.constant 0 : i32
    return %arg0, %c0_i32 : i32, i32
  }
  func.func @transform_1(%arg0: i32) -> (i32, i32) {
    %c0_i32 = arith.constant 0 : i32
    %c0_i32_0 = arith.constant 0 : i32
    %c0_i32_1 = arith.constant 0 : i32
    return %c0_i32, %c0_i32_0 : i32, i32
  }
  func.func @transform_2(%arg0: i32) -> (i32, i32) {
    %c0_i32 = arith.constant 0 : i32
    %c0_i32_0 = arith.constant 0 : i32
    %c0_i32_1 = arith.constant 0 : i32
    return %c0_i32, %c0_i32_0 : i32, i32
  }
  func.func @transform_3(%arg0: i32) -> (i32, i32) {
    %c0_i32 = arith.constant 0 : i32
    %c0_i32_0 = arith.constant 0 : i32
    %c0_i32_1 = arith.constant 0 : i32
    return %c0_i32, %c0_i32_0 : i32, i32
  }
  func.func @transform_4(%arg0: i32) -> (i32, i32) {
    %c0_i32 = arith.constant 0 : i32
    %c0_i32_0 = arith.constant 0 : i32
    return %arg0, %c0_i32 : i32, i32
  }
  func.func @transform_5(%arg0: i32) -> (i32, i32, i32) {
    %c0_i32 = arith.constant 0 : i32
    %c0_i32_0 = arith.constant 0 : i32
    %c0_i32_1 = arith.constant 0 : i32
    return %arg0, %c0_i32, %c0_i32_0 : i32, i32, i32
  }
}

</mosaic_0001>

<llo_original>
// kernel: tpu_custom_call.1
$region0: #{tpu_custom_call.1}
  #allocation0 [shape = 'u32[]', space=smem, size = 0x4, offset = 0x4, fixed_abs, tag = 'smem constant byte address 0x4 - core index']
  #allocation1 [shape = 'u32[144,128]{1,0:T(1,128)}', space=vmem, size = 0x12000, scoped, tag = 'internal scratch']
  %s0 = inlined_call_operand.vmem [shape: f32[20,128], index: 0, kind: input, shape index: {}]
  %s1 = inlined_call_operand.hbm [shape: bf16[128,128], index: 1, kind: input, shape index: {}]
  %s2 = inlined_call_operand.hbm [shape: bf16[128,128], index: 2, kind: input, shape index: {}]
  %s3 = inlined_call_operand.vmem [shape: f32[1,128], index: 3, kind: input, shape index: {}]
  %s4 = inlined_call_operand.vmem [shape: s32[20,2], index: 4, kind: input, shape index: {}]
  %s5 = inlined_call_operand.hbm [shape: f32[3,1,128], index: 5, kind: output, shape index: {}]
  %s6 = sld [smem:[#allocation0]]
  $region61: #{tpu_custom_call.1} parent=0
    _
  %s8 = ssub.s32 1, %s6
  %s9 = scalar_select 0, %s8, %s6
  $region1: #{tpu_custom_call.1} parent=0
    #allocation2 [shape = 'u8[32768]{0}', space=vmem, size = 0x8000, scoped, tag = 'input window, operand 1, single buffered']
    #allocation3 [shape = 's32[2]{0}', space=sflag, size = 0x8, scoped, tag = 'scoped memory for tpu_custom_call.1']
    #allocation4 [shape = 's32[2]{0}', space=sflag, size = 0x8, scoped, tag = 'scoped memory for tpu_custom_call.1']
    #allocation5 [shape = 'u8[32768]{0}', space=vmem, size = 0x8000, scoped, tag = 'input window, operand 2, single buffered']
    #allocation6 [shape = 's32[1]{0}', space=sflag, size = 0x4, scoped, tag = 'scoped memory for tpu_custom_call.1']
    #allocation7 [shape = 'u8[1024]{0}', space=vmem, size = 0x400, scoped, tag = 'output window, operand 0']
    %10 = vsyncpa [#allocation3], 0
    %11 = vsyncpa [#allocation6], 0
    %12 = vsyncpa [#allocation4], 0
    %s13 = scalar_lea.sflag [#allocation4], 1
    %14 = vsyncpa %s13, 0
    loop: start=0, step=1, limit=5
    $region2: #{tpu_custom_call.1} parent=1 // loop_pre_header
      _
    $region3: #{tpu_custom_call.1} parent=1 // loop_header
      %s16 = sphi 0, %s20
      %p17 = scmp.ge.s32.totalorder %s16, 5
      %s26 = sphi 0, %s28
      %s29 = sphi 0, %s26
      %s30 = sphi 0, %s29
      %s46 = sphi 0, %s30
      %s50 = sphi 0, %s50
      %s52 = sphi 0, %s50
      %s53 = sphi 0, %s52
      %s67 = sphi 0, %s53
      %s71 = sphi 0, %s71
      %s73 = sphi 0, %s71
      %s74 = sphi 0, %s73
      %s88 = sphi 0, %s74
      %s92 = sphi 0, %s92
      %s94 = sphi 0, %s92
      %s95 = sphi 0, %s94
      %s109 = sphi 0, %s95
      %s115 = sphi 0, %s117
      %s118 = sphi 0, %s115
      %s119 = sphi 0, %s118
      %s135 = sphi 0, %s119
      %s141 = sphi 0, %s143
      %s144 = sphi 0, %s141
      %s145 = sphi 0, %s144
      %s161 = sphi 0, %s145
    $region4: #{tpu_custom_call.1} parent=1 // loop_header_branch
      %19 = sbr.rel (%p17) target = $region8
    $region5: #{tpu_custom_call.1} parent=1 // loop_body
      %s21 = ssub.s32 %s16, 1
      %s22 = ssub.s32 %s16, 2
      %s23 = sadd.s32 %s16, 1
      %s24 = ssub.s32 %s16, %s23
      %p25 = scmp.eq.s32.totalorder %s24, 0
      %s27 = sadd.s32 %s26, 1
      %s28 = scalar_select %p25, %s26, %s27
      %p31 = pneg %p25
      %p32 = scmp.eq.s32.totalorder %s16, 2
      %p33 = por %p31, %p32
      %p34 = scmp.ne.s32.totalorder %s26, %s29
      %p35 = scmp.eq.s32.totalorder %s16, 0
      %p36 = por %p34, %p35
      %p37 = scmp.ne.s32.totalorder %s26, %s29
      %p38 = scmp.eq.s32.totalorder %s21, 2
      %p39 = por %p37, %p38
      %p40 = scmp.ne.s32.totalorder %s29, %s30
      %p41 = scmp.eq.s32.totalorder %s21, 0
      %p42 = por %p40, %p41
      %p43 = scmp.ne.s32.totalorder %s29, %s30
      %p44 = scmp.eq.s32.totalorder %s22, 2
      %p45 = por %p43, %p44
      %p47 = scmp.ne.s32.totalorder %s30, %s46
      %p48 = scmp.eq.s32.totalorder %s22, 0
      %p49 = por %p47, %p48
      %s51 = sadd.s32 %s50, 1
      %p54 = scmp.eq.s32.totalorder %s16, 2
      %p55 = scmp.ne.s32.totalorder %s50, %s52
      %p56 = scmp.eq.s32.totalorder %s16, 0
      %p57 = por %p55, %p56
      %p58 = scmp.ne.s32.totalorder %s50, %s52
      %p59 = scmp.eq.s32.totalorder %s21, 2
      %p60 = por %p58, %p59
      %p61 = scmp.ne.s32.totalorder %s52, %s53
      %p62 = scmp.eq.s32.totalorder %s21, 0
      %p63 = por %p61, %p62
      %p64 = scmp.ne.s32.totalorder %s52, %s53
      %p65 = scmp.eq.s32.totalorder %s22, 2
      %p66 = por %p64, %p65
      %p68 = scmp.ne.s32.totalorder %s53, %s67
      %p69 = scmp.eq.s32.totalorder %s22, 0
      %p70 = por %p68, %p69
      %s72 = sadd.s32 %s71, 1
      %p75 = scmp.eq.s32.totalorder %s16, 2
      %p76 = scmp.ne.s32.totalorder %s71, %s73
      %p77 = scmp.eq.s32.totalorder %s16, 0
      %p78 = por %p76, %p77
      %p79 = scmp.ne.s32.totalorder %s71, %s73
      %p80 = scmp.eq.s32.totalorder %s21, 2
      %p81 = por %p79, %p80
      %p82 = scmp.ne.s32.totalorder %s73, %s74
      %p83 = scmp.eq.s32.totalorder %s21, 0
      %p84 = por %p82, %p83
      %p85 = scmp.ne.s32.totalorder %s73, %s74
      %p86 = scmp.eq.s32.totalorder %s22, 2
      %p87 = por %p85, %p86
      %p89 = scmp.ne.s32.totalorder %s74, %s88
      %p90 = scmp.eq.s32.totalorder %s22, 0
      %p91 = por %p89, %p90
      %s93 = sadd.s32 %s92, 1
      %p96 = scmp.eq.s32.totalorder %s16, 2
      %p97 = scmp.ne.s32.totalorder %s92, %s94
      %p98 = scmp.eq.s32.totalorder %s16, 0
      %p99 = por %p97, %p98
      %p100 = scmp.ne.s32.totalorder %s92, %s94
      %p101 = scmp.eq.s32.totalorder %s21, 2
      %p102 = por %p100, %p101
      %p103 = scmp.ne.s32.totalorder %s94, %s95
      %p104 = scmp.eq.s32.totalorder %s21, 0
      %p105 = por %p103, %p104
      %p106 = scmp.ne.s32.totalorder %s94, %s95
      %p107 = scmp.eq.s32.totalorder %s22, 2
      %p108 = por %p106, %p107
      %p110 = scmp.ne.s32.totalorder %s95, %s109
      %p111 = scmp.eq.s32.totalorder %s22, 0
      %p112 = por %p110, %p111
      %s113 = ssub.s32 %s16, %s23
      %p114 = scmp.eq.s32.totalorder %s113, 0
      %s116 = sadd.s32 %s115, 1
      %s117 = scalar_select %p114, %s115, %s116
      %p120 = pneg %p114
      %p121 = scmp.eq.s32.totalorder %s16, 2
      %p122 = por %p120, %p121
      %p123 = scmp.ne.s32.totalorder %s115, %s118
      %p124 = scmp.eq.s32.totalorder %s16, 0
      %p125 = por %p123, %p124
      %p126 = scmp.ne.s32.totalorder %s115, %s118
      %p127 = scmp.eq.s32.totalorder %s21, 2
      %p128 = por %p126, %p127
      %p129 = scmp.ne.s32.totalorder %s118, %s119
      %p130 = scmp.eq.s32.totalorder %s21, 0
      %p131 = por %p129, %p130
      %p132 = scmp.ne.s32.totalorder %s118, %s119
      %p133 = scmp.eq.s32.totalorder %s22, 2
      %p134 = por %p132, %p133
      %p136 = scmp.ne.s32.totalorder %s119, %s135
      %p137 = scmp.eq.s32.totalorder %s22, 0
      %p138 = por %p136, %p137
      %s139 = ssub.s32 %s16, %s23
      %p140 = scmp.eq.s32.totalorder %s139, 0
      %s142 = sadd.s32 %s141, 1
      %s143 = scalar_select %p140, %s141, %s142
      %p146 = pneg %p140
      %p147 = scmp.eq.s32.totalorder %s16, 2
      %p148 = por %p146, %p147
      %p149 = scmp.ne.s32.totalorder %s141, %s144
      %p150 = scmp.eq.s32.totalorder %s16, 0
      %p151 = por %p149, %p150
      %p152 = scmp.ne.s32.totalorder %s141, %s144
      %p153 = scmp.eq.s32.totalorder %s21, 2
      %p154 = por %p152, %p153
      %p155 = scmp.ne.s32.totalorder %s144, %s145
      %p156 = scmp.eq.s32.totalorder %s21, 0
      %p157 = por %p155, %p156
      %p158 = scmp.ne.s32.totalorder %s144, %s145
      %p159 = scmp.eq.s32.totalorder %s22, 2
      %p160 = por %p158, %p159
      %p162 = scmp.ne.s32.totalorder %s145, %s161
      %p163 = scmp.eq.s32.totalorder %s22, 0
      %p164 = por %p162, %p163
      %p165 = scmp.le.s32.totalorder 1, %s16
      %p166 = scmp.lt.s32.totalorder %s16, 4
      %p167 = pnand %p165, %p166
      %p168 = pneg %p167
      // Predicated region
      $region9: #{tpu_custom_call.1} parent=5 // pred_check
        _
      $region10: #{tpu_custom_call.1} parent=5 // pred_check_branch
        %170 = sbr.rel (%p167) target = $region12
      $region11: #{tpu_custom_call.1} parent=5 // pred_region
        %s171 = ssub.s32 %s16, 1
        // Predicated region
        $region13: #{tpu_custom_call.1} parent=11 // pred_check
          %p172 = pneg %p63
        $region14: #{tpu_custom_call.1} parent=11 // pred_check_branch
          %174 = sbr.rel (%p172) target = $region16
        $region15: #{tpu_custom_call.1} parent=11 // pred_region
          %s176 = ssub.s32 1024, 1024
          %177 = vsyncadd [#allocation3], %s176
          %s178 = sshll.u32 [#allocation2], 4
          %s179 = int_to_ptr.vmem [resolvable:$true] %s178
          %184 = dma.hbm_to_vmem [thread:$0]  %s1, 1024, %s179, [#allocation3], 64, 64, 4
        $region16: #{tpu_custom_call.1} parent=11 // pred_fallthru
          _
        // Predicated region
        $region17: #{tpu_custom_call.1} parent=11 // pred_check
          %p185 = pneg %p84
        $region18: #{tpu_custom_call.1} parent=11 // pred_check_branch
          %187 = sbr.rel (%p185) target = $region20
        $region19: #{tpu_custom_call.1} parent=11 // pred_region
          %s189 = ssub.s32 1024, 1024
          %190 = vsyncadd [#allocation6], %s189
          %s191 = sshll.u32 [#allocation5], 4
          %s192 = int_to_ptr.vmem [resolvable:$true] %s191
          %197 = dma.hbm_to_vmem [thread:$0]  %s2, 1024, %s192, [#allocation6], 64, 64, 4
        $region20: #{tpu_custom_call.1} parent=11 // pred_fallthru
          _
        // Predicated region
        $region21: #{tpu_custom_call.1} parent=11 // pred_check
          %p198 = pneg %p105
        $region22: #{tpu_custom_call.1} parent=11 // pred_check_branch
          %200 = sbr.rel (%p198) target = $region24
        $region23: #{tpu_custom_call.1} parent=11 // pred_region
          _
        $region24: #{tpu_custom_call.1} parent=11 // pred_fallthru
          _
      $region12: #{tpu_custom_call.1} parent=5 // pred_fallthru
        _
      %p201 = scmp.lt.s32.totalorder %s16, 3
      // Predicated region
      $region25: #{tpu_custom_call.1} parent=5 // pred_check
        %p202 = pneg %p201
      $region26: #{tpu_custom_call.1} parent=5 // pred_check_branch
        %204 = sbr.rel (%p202) target = $region28
      $region27: #{tpu_custom_call.1} parent=5 // pred_region
        // Predicated region
        $region29: #{tpu_custom_call.1} parent=27 // pred_check
          %p205 = pneg %p36
        $region30: #{tpu_custom_call.1} parent=27 // pred_check_branch
          %207 = sbr.rel (%p205) target = $region32
        $region31: #{tpu_custom_call.1} parent=27 // pred_region
          %p208 = scmp.lt.s32.totalorder %s16, 2
          %s209 = scalar_select %p208, %s16, 2
          %s210 = smul.addr %s209, 8
          %s211 = scalar_lea.vmem %s0, %s210
        $region32: #{tpu_custom_call.1} parent=27 // pred_fallthru
          _
        // Predicated region
        $region33: #{tpu_custom_call.1} parent=27 // pred_check
          %p212 = pneg %p125
        $region34: #{tpu_custom_call.1} parent=27 // pred_check_branch
          %214 = sbr.rel (%p212) target = $region36
        $region35: #{tpu_custom_call.1} parent=27 // pred_region
          %p215 = scmp.lt.s32.totalorder %s16, 2
          %s216 = scalar_select %p215, %s16, 2
          %s217 = smul.addr %s216, 8
          %s218 = scalar_lea.vmem %s4, %s217
        $region36: #{tpu_custom_call.1} parent=27 // pred_fallthru
          _
      $region28: #{tpu_custom_call.1} parent=5 // pred_fallthru
        _
      %p219 = scmp.le.s32.totalorder 1, %s16
      %p220 = scmp.lt.s32.totalorder %s16, 4
      %p221 = pnand %p219, %p220
      %p222 = pneg %p221
      // Predicated region
      $region37: #{tpu_custom_call.1} parent=5 // pred_check
        _
      $region38: #{tpu_custom_call.1} parent=5 // pred_check_branch
        %224 = sbr.rel (%p221) target = $region40
      $region39: #{tpu_custom_call.1} parent=5 // pred_region
        %s225 = ssub.s32 %s16, 1
        // Predicated region
        $region41: #{tpu_custom_call.1} parent=39 // pred_check
          %p226 = pneg %p63
        $region42: #{tpu_custom_call.1} parent=39 // pred_check_branch
          %228 = sbr.rel (%p226) target = $region44
        $region43: #{tpu_custom_call.1} parent=39 // pred_region
          %229 = dma.done [#allocation3], 1024
        $region44: #{tpu_custom_call.1} parent=39 // pred_fallthru
          _
        // Predicated region
        $region45: #{tpu_custom_call.1} parent=39 // pred_check
          %p230 = pneg %p84
        $region46: #{tpu_custom_call.1} parent=39 // pred_check_branch
          %232 = sbr.rel (%p230) target = $region48
        $region47: #{tpu_custom_call.1} parent=39 // pred_region
          %233 = dma.done [#allocation6], 1024
        $region48: #{tpu_custom_call.1} parent=39 // pred_fallthru
          _
        %p234 = scmp.lt.s32.totalorder %s21, 2
        %s235 = scalar_select %p234, %s21, 2
        %s236 = smul.addr %s235, 8
        %s237 = scalar_lea.vmem %s0, %s236
        %p238 = pneg %p42
        %p239 = pneg %p39
        %p240 = pneg %p63
        %p241 = pneg %p60
        %p242 = pneg %p84
        %p243 = pneg %p81
        %p244 = pneg %p105
        %p245 = pneg %p102
        %p246 = scmp.lt.s32.totalorder %s21, 2
        %s247 = scalar_select %p246, %s21, 2
        %s248 = smul.addr %s247, 8
        %s249 = scalar_lea.vmem %s4, %s248
        %p250 = pneg %p131
        %p251 = pneg %p128
        %p252 = pneg %p157
        %p253 = pneg %p154
        %s254 = sand.u32 %s144, 1
        %s255 = scalar_lea.sflag [#allocation4], %s254
        %s256 = sand.u32 %s144, 1
        %s257 = scalar_lea.vmem [#allocation7], %s256
        %p258 = scmp.lt.s32.totalorder %s21, 2
        %s259 = scalar_select %p258, %s21, 2
        %s260 = smul.addr %s259, 8
        %s261 = scalar_lea.vmem %s0, %s260
        %p262 = scmp.lt.s32.totalorder %s21, 2
        %s263 = scalar_select %p262, %s21, 2
        %s264 = smul.addr %s263, 8
        %s265 = scalar_lea.vmem %s4, %s264
        %v267 = vld [vmem:[%s261] sm:$0xff]
        %v268 = vmul.f32 %v267, %v267
        %269 = vadd.xlane.f32.xlu0 %v268
        %v270 = vpop.xlane.xlu0 %269
        %v271 = vrsqrt.pop %v270
        %v272 = vmul.f32 %v270, %v271
        %vm273 = vcmp.eq.f32.partialorder %v270, inf
        %v274 = vsel %vm273, %v270, %v272
        %vm275 = vcmp.eq.f32.partialorder %v270, 0.0
        %v276 = vand.u32 %v270, 2147483648
        %v277 = vsel %vm275, %v276, %v274
        %v278 = vmax.f32 %v277, 1e-12
        %v279 = vrcp.pop %v278
        %v280 = vmul.f32 %v267, %v279
        %v281 = vmul.f32 %v280, %v280
        %v282 = vmul.f32 %v280, 2e-06
        %v283 = vadd.f32 %v281, %v282
        %284 = vadd.xlane.f32.xlu0 %v283
        %v285 = vpop.xlane.xlu0 %284
        %v286 = vadd.f32 %v285, 1.28e-10
        %v287 = vpack.c.bf16 %v280, %v280
        %v288 = vunpack.c.l.bf16 %v287
        %v289 = vsub.f32 %v280, %v288
        %v290 = vpack.c.bf16 %v289, %v289
        %v291 = vld [vmem:[#allocation2] sm:$0xf]
        %v292 = vld [vmem:[#allocation2 + $0x4] sm:$0xf]
        %v293 = vld [vmem:[#allocation2 + $0x8] sm:$0xf]
        %v294 = vld [vmem:[#allocation2 + $0xc] sm:$0xf]
        %v295 = vld [vmem:[#allocation2 + $0x10] sm:$0xf]
        %v296 = vld [vmem:[#allocation2 + $0x14] sm:$0xf]
        %v297 = vld [vmem:[#allocation2 + $0x18] sm:$0xf]
        %v298 = vld [vmem:[#allocation2 + $0x1c] sm:$0xf]
        %v299 = vld [vmem:[#allocation2 + $0x20] sm:$0xf]
        %v300 = vld [vmem:[#allocation2 + $0x24] sm:$0xf]
        %v301 = vld [vmem:[#allocation2 + $0x28] sm:$0xf]
        %v302 = vld [vmem:[#allocation2 + $0x2c] sm:$0xf]
        %v303 = vld [vmem:[#allocation2 + $0x30] sm:$0xf]
        %v304 = vld [vmem:[#allocation2 + $0x34] sm:$0xf]
        %v305 = vld [vmem:[#allocation2 + $0x38] sm:$0xf]
        %v306 = vld [vmem:[#allocation2 + $0x3c] sm:$0xf]
        %v307 = vld [vmem:[#allocation5] sm:$0xf]
        %v308 = vld [vmem:[#allocation5 + $0x4] sm:$0xf]
        %v309 = vld [vmem:[#allocation5 + $0x8] sm:$0xf]
        %v310 = vld [vmem:[#allocation5 + $0xc] sm:$0xf]
        %v311 = vld [vmem:[#allocation5 + $0x10] sm:$0xf]
        %v312 = vld [vmem:[#allocation5 + $0x14] sm:$0xf]
        %v313 = vld [vmem:[#allocation5 + $0x18] sm:$0xf]
        %v314 = vld [vmem:[#allocation5 + $0x1c] sm:$0xf]
        %v315 = vld [vmem:[#allocation5 + $0x20] sm:$0xf]
        %v316 = vld [vmem:[#allocation5 + $0x24] sm:$0xf]
        %v317 = vld [vmem:[#allocation5 + $0x28] sm:$0xf]
        %v318 = vld [vmem:[#allocation5 + $0x2c] sm:$0xf]
        %v319 = vld [vmem:[#allocation5 + $0x30] sm:$0xf]
        %v320 = vld [vmem:[#allocation5 + $0x34] sm:$0xf]
        %v321 = vld [vmem:[#allocation5 + $0x38] sm:$0xf]
        %v322 = vld [vmem:[#allocation5 + $0x3c] sm:$0xf]
        %v339 = vunpack.c.l.b16 %v307
        %v340 = vunpack.c.l.b16 %v308
        %v341 = vunpack.c.l.b16 %v309
        %v342 = vunpack.c.l.b16 %v310
        %v343 = vunpack.c.l.b16 %v311
        %v344 = vunpack.c.l.b16 %v312
        %v345 = vunpack.c.l.b16 %v313
        %v346 = vunpack.c.l.b16 %v314
        %v347 = vunpack.c.l.b16 %v315
        %v348 = vunpack.c.l.b16 %v316
        %v349 = vunpack.c.l.b16 %v317
        %v350 = vunpack.c.l.b16 %v318
        %v351 = vunpack.c.l.b16 %v319
        %v352 = vunpack.c.l.b16 %v320
        %v353 = vunpack.c.l.b16 %v321
        %v354 = vunpack.c.l.b16 %v322
        %v355 = vpack.c.b16 %v340, %v339
        %v356 = vpack.c.b16 %v342, %v341
        %v357 = vpack.c.b16 %v344, %v343
        %v358 = vpack.c.b16 %v346, %v345
        %v359 = vpack.c.b16 %v348, %v347
        %v360 = vpack.c.b16 %v350, %v349
        %v361 = vpack.c.b16 %v352, %v351
        %v362 = vpack.c.b16 %v354, %v353
        %371 = vmatprep.subr.bf16.mxu0 0
        %372 = vmatpush1.bf16.msra.mxu0 %v362
        %373 = vmatprep.subr.bf16.mxu0 0
        %374 = vmatpush1.bf16.msra.mxu0 %v361
        %375 = vmatprep.subr.bf16.mxu0 0
        %376 = vmatpush1.bf16.msra.mxu0 %v360
        %377 = vmatprep.subr.bf16.mxu0 0
        %378 = vmatpush1.bf16.msra.mxu0 %v359
        %379 = vmatprep.subr.bf16.mxu0 0
        %380 = vmatpush1.bf16.msra.mxu0 %v358
        %381 = vmatprep.subr.bf16.mxu0 0
        %382 = vmatpush1.bf16.msra.mxu0 %v357
        %383 = vmatprep.subr.bf16.mxu0 0
        %384 = vmatpush1.bf16.msra.mxu0 %v356
        %385 = vmatprep.subr.bf16.mxu0 0
        %386 = vmatpush1.bf16.msra.mxu0 %v355
        %387 = vmatprep.subr.bf16.mxu0 0
        %388 = vmatpush2.bf16.msra.mxu0 0
        %389 = vmatprep.subr.bf16.mxu0 0
        %390 = vmatpush2.bf16.msra.mxu0 0
        %391 = vmatprep.subr.bf16.mxu0 0
        %392 = vmatpush2.bf16.msra.mxu0 0
        %393 = vmatprep.subr.bf16.mxu0 0
        %394 = vmatpush2.bf16.msra.mxu0 0
        %395 = vmatprep.subr.bf16.mxu0 0
        %396 = vmatpush2.bf16.msra.mxu0 0
        %397 = vmatprep.subr.bf16.mxu0 0
        %398 = vmatpush2.bf16.msra.mxu0 0
        %399 = vmatprep.subr.bf16.mxu0 0
        %400 = vmatpush2.bf16.msra.mxu0 0
        %401 = vmatprep.subr.bf16.mxu0 0
        %402 = vmatpush2.bf16.msra.mxu0 0
        %403 = vmatprep.mubr.bf16.mxu0 0
        %404 = vmatmul.mubr.bf16.gmra.mxu0 %v287
        %v405 = vpop.f32.mrf.mxu0
        %v406 = vadd.f32 0.0, %v405
        %v407 = vpop.f32.mrf.mxu0
        %v408 = vpop.f32.mrf.mxu0
        %v409 = vpop.f32.mrf.mxu0
        %410 = vdwg.mxu0
        %v427 = vunpack.c.l.b16 %v291
        %v428 = vunpack.c.l.b16 %v292
        %v429 = vunpack.c.l.b16 %v293
        %v430 = vunpack.c.l.b16 %v294
        %v431 = vunpack.c.l.b16 %v295
        %v432 = vunpack.c.l.b16 %v296
        %v433 = vunpack.c.l.b16 %v297
        %v434 = vunpack.c.l.b16 %v298
        %v435 = vunpack.c.l.b16 %v299
        %v436 = vunpack.c.l.b16 %v300
        %v437 = vunpack.c.l.b16 %v301
        %v438 = vunpack.c.l.b16 %v302
        %v439 = vunpack.c.l.b16 %v303
        %v440 = vunpack.c.l.b16 %v304
        %v441 = vunpack.c.l.b16 %v305
        %v442 = vunpack.c.l.b16 %v306
        %v443 = vpack.c.b16 %v428, %v427
        %v444 = vpack.c.b16 %v430, %v429
        %v445 = vpack.c.b16 %v432, %v431
        %v446 = vpack.c.b16 %v434, %v433
        %v447 = vpack.c.b16 %v436, %v435
        %v448 = vpack.c.b16 %v438, %v437
        %v449 = vpack.c.b16 %v440, %v439
        %v450 = vpack.c.b16 %v442, %v441
        %459 = vmatprep.subr.bf16.mxu0 0
        %460 = vmatpush1.bf16.msra.mxu0 %v450
        %461 = vmatprep.subr.bf16.mxu0 0
        %462 = vmatpush1.bf16.msra.mxu0 %v449
        %463 = vmatprep.subr.bf16.mxu0 0
        %464 = vmatpush1.bf16.msra.mxu0 %v448
        %465 = vmatprep.subr.bf16.mxu0 0
        %466 = vmatpush1.bf16.msra.mxu0 %v447
        %467 = vmatprep.subr.bf16.mxu0 0
        %468 = vmatpush1.bf16.msra.mxu0 %v446
        %469 = vmatprep.subr.bf16.mxu0 0
        %470 = vmatpush1.bf16.msra.mxu0 %v445
        %471 = vmatprep.subr.bf16.mxu0 0
        %472 = vmatpush1.bf16.msra.mxu0 %v444
        %473 = vmatprep.subr.bf16.mxu0 0
        %474 = vmatpush1.bf16.msra.mxu0 %v443
        %475 = vmatprep.subr.bf16.mxu0 0
        %476 = vmatpush2.bf16.msra.mxu0 0
        %477 = vmatprep.subr.bf16.mxu0 0
        %478 = vmatpush2.bf16.msra.mxu0 0
        %479 = vmatprep.subr.bf16.mxu0 0
        %480 = vmatpush2.bf16.msra.mxu0 0
        %481 = vmatprep.subr.bf16.mxu0 0
        %482 = vmatpush2.bf16.msra.mxu0 0
        %483 = vmatprep.subr.bf16.mxu0 0
        %484 = vmatpush2.bf16.msra.mxu0 0
        %485 = vmatprep.subr.bf16.mxu0 0
        %486 = vmatpush2.bf16.msra.mxu0 0
        %487 = vmatprep.subr.bf16.mxu0 0
        %488 = vmatpush2.bf16.msra.mxu0 0
        %489 = vmatprep.subr.bf16.mxu0 0
        %490 = vmatpush2.bf16.msra.mxu0 0
        %491 = vmatprep.mubr.bf16.mxu0 0
        %492 = vmatmul.mubr.bf16.gmra.mxu0 %v287
        %v493 = vpop.f32.mrf.mxu0
        %v494 = vadd.f32 %v406, %v493
        %v495 = vpop.f32.mrf.mxu0
        %v496 = vpop.f32.mrf.mxu0
        %v497 = vpop.f32.mrf.mxu0
        %498 = vdwg.mxu0
        %499 = vmatprep.subr.bf16.mxu0 0
        %500 = vmatpush1.bf16.msra.mxu0 %v450
        %501 = vmatprep.subr.bf16.mxu0 0
        %502 = vmatpush1.bf16.msra.mxu0 %v449
        %503 = vmatprep.subr.bf16.mxu0 0
        %504 = vmatpush1.bf16.msra.mxu0 %v448
        %505 = vmatprep.subr.bf16.mxu0 0
        %506 = vmatpush1.bf16.msra.mxu0 %v447
        %507 = vmatprep.subr.bf16.mxu0 0
        %508 = vmatpush1.bf16.msra.mxu0 %v446
        %509 = vmatprep.subr.bf16.mxu0 0
        %510 = vmatpush1.bf16.msra.mxu0 %v445
        %511 = vmatprep.subr.bf16.mxu0 0
        %512 = vmatpush1.bf16.msra.mxu0 %v444
        %513 = vmatprep.subr.bf16.mxu0 0
        %514 = vmatpush1.bf16.msra.mxu0 %v443
        %515 = vmatprep.subr.bf16.mxu0 0
        %516 = vmatpush2.bf16.msra.mxu0 0
        %517 = vmatprep.subr.bf16.mxu0 0
        %518 = vmatpush2.bf16.msra.mxu0 0
        %519 = vmatprep.subr.bf16.mxu0 0
        %520 = vmatpush2.bf16.msra.mxu0 0
        %521 = vmatprep.subr.bf16.mxu0 0
        %522 = vmatpush2.bf16.msra.mxu0 0
        %523 = vmatprep.subr.bf16.mxu0 0
        %524 = vmatpush2.bf16.msra.mxu0 0
        %525 = vmatprep.subr.bf16.mxu0 0
        %526 = vmatpush2.bf16.msra.mxu0 0
        %527 = vmatprep.subr.bf16.mxu0 0
        %528 = vmatpush2.bf16.msra.mxu0 0
        %529 = vmatprep.subr.bf16.mxu0 0
        %530 = vmatpush2.bf16.msra.mxu0 0
        %531 = vmatprep.mubr.bf16.mxu0 0
        %532 = vmatmul.mubr.bf16.gmra.mxu0 %v290
        %v533 = vpop.f32.mrf.mxu0
        %v534 = vadd.f32 0.0, %v533
        %v535 = vpop.f32.mrf.mxu0
        %v536 = vpop.f32.mrf.mxu0
        %v537 = vpop.f32.mrf.mxu0
        %538 = vdwg.mxu0
        %v539 = vadd.f32 %v494, %v534
        %v540 = vld [vmem:[%s3] sm:$0x1]
        %v541 = vmul.f32 %v539, 2.0
        %v543 = vlaneseq
        %v544 = vshrl.u32 %v543, 7
        %v545 = vsub.s32 0, %v544
        %v546 = vrot.slane %v540, %v545
        %v548 = vsub.f32 %v546, %v541
        %v549 = vlaneseq
        %v550 = vand.u32 %v549, 127
        %v551 = vld [vmem:[%s265] sm:$0xff]
        %552 = vset.pattern.permute.xlu0 0
        %553 = vperm.xlu0 %552, %v551
        %v554 = vpop.permute.xlu0 %553
        %vm555 = vcmp.eq.s32.totalorder %v550, %v554
        %556 = vset.pattern.permute.xlu0 1
        %557 = vperm.xlu0 %556, %v551
        %v558 = vpop.permute.xlu0 %557
        %vm559 = vcmp.eq.s32.totalorder %v550, %v558
        %v560 = vsel %vm555, %v548, 0.0
        %561 = vadd.xlane.f32.xlu0 %v560
        %v562 = vpop.xlane.xlu0 %561
        %v563 = vadd.f32 %v286, %v562
        %v564 = vsel %vm559, %v548, 0.0
        %565 = vadd.xlane.f32.xlu0 %v564
        %v566 = vpop.xlane.xlu0 %565
        %v567 = vadd.f32 %v286, %v566
        %v568 = vmax.f32 %v563, 0.0
        %v569 = vrsqrt.pop %v568
        %v570 = vmul.f32 %v568, %v569
        %vm571 = vcmp.eq.f32.partialorder %v568, inf
        %v572 = vsel %vm571, %v568, %v570
        %vm573 = vcmp.eq.f32.partialorder %v568, 0.0
        %v574 = vand.u32 %v568, 2147483648
        %v575 = vsel %vm573, %v574, %v572
        %v576 = vmax.f32 %v567, 0.0
        %v577 = vrsqrt.pop %v576
        %v578 = vmul.f32 %v576, %v577
        %vm579 = vcmp.eq.f32.partialorder %v576, inf
        %v580 = vsel %vm579, %v576, %v578
        %vm581 = vcmp.eq.f32.partialorder %v576, 0.0
        %v582 = vand.u32 %v576, 2147483648
        %v583 = vsel %vm581, %v582, %v580
        %v584 = vsub.f32 %v575, %v583
        %v585 = vadd.f32 %v584, 1.0
        %v586 = vmax.f32 %v585, 0.0
        %s587 = smul.u32 %s21, 8
        %v588 = vlaneseq
        %v589 = vshrl.u32 %v588, 7
        %v590 = vstv %s587
        %v591 = vadd.s32 %v590, %v589
        %vm592 = vcmp.lt.s32.totalorder %v591, 20
        %v593 = vsel %vm592, %v586, 0.0
        %vm594 = vcmask 7168
        %v595 = vsel %vm594, %v593, 0.0
        %596 = vadd.xlane.f32.xlu0 %v595
        %v597 = vpop.xlane.xlu0 %596
        %v598 = vrot.slane %v597, 4
        %v599 = vadd.f32 %v597, %v598
        %v600 = vrot.slane %v599, 2
        %v601 = vadd.f32 %v599, %v600
        %v602 = vrot.slane %v601, 1
        %v603 = vadd.f32 %v601, %v602
        %s604 = vtos %v603
        %v605 = vstv %s604
        %606 = vst [vmem:[%s257] sm:$0x1] %v605
        %s607 = sand.u32 %s144, 1
        %s608 = scalar_lea.sflag [#allocation4], %s607
        %s609 = sand.u32 %s144, 1
        %s610 = scalar_lea.vmem [#allocation7], %s609
        // Predicated region
        $region49: #{tpu_custom_call.1} parent=39 // pred_check
          %p611 = pneg %p154
        $region50: #{tpu_custom_call.1} parent=39 // pred_check_branch
          %613 = sbr.rel (%p611) target = $region52
        $region51: #{tpu_custom_call.1} parent=39 // pred_region
          %s615 = ssub.s32 16, 16
          %616 = vsyncadd %s608, %s615
          %s617 = smul.addr %s21, 16
          %s618 = scalar_lea.hbm %s5, %s617
          %s620 = sshll.u32 %s610, 4
          %s621 = int_to_ptr.vmem [resolvable:$true] %s620
          %623 = dma.vmem_to_hbm [thread:$0]  %s621, 16, %s618, %s608
        $region52: #{tpu_custom_call.1} parent=39 // pred_fallthru
          _
      $region40: #{tpu_custom_call.1} parent=5 // pred_fallthru
        _
      %p624 = scmp.le.s32.totalorder 2, %s16
      // Predicated region
      $region53: #{tpu_custom_call.1} parent=5 // pred_check
        %p625 = pneg %p624
      $region54: #{tpu_custom_call.1} parent=5 // pred_check_branch
        %627 = sbr.rel (%p625) target = $region56
      $region55: #{tpu_custom_call.1} parent=5 // pred_region
        %s628 = ssub.s32 %s16, 2
        // Predicated region
        $region57: #{tpu_custom_call.1} parent=55 // pred_check
          %p629 = pneg %p160
        $region58: #{tpu_custom_call.1} parent=55 // pred_check_branch
          %631 = sbr.rel (%p629) target = $region60
        $region59: #{tpu_custom_call.1} parent=55 // pred_region
          %s632 = sand.u32 %s145, 1
          %s633 = scalar_lea.sflag [#allocation4], %s632
          %s634 = sand.u32 %s145, 1
          %s635 = scalar_lea.vmem [#allocation7], %s634
          %636 = dma.done %s633, 16
        $region60: #{tpu_custom_call.1} parent=55 // pred_fallthru
          _
      $region56: #{tpu_custom_call.1} parent=5 // pred_fallthru
        _
    $region6: #{tpu_custom_call.1} parent=1 // loop_footer
      %s20 = sadd.s32 1, %s16
    $region7: #{tpu_custom_call.1} parent=1 // loop_footer_branch
      %15 = sbr.rel target = $region3
    $region8: #{tpu_custom_call.1} parent=1 // loop_exit
      _
    %637 = vsyncpa [#allocation3], 1
    %s638 = scalar_lea.sflag [#allocation3], 1
    %639 = vsyncpa %s638, 1
    %640 = vsyncpa [#allocation6], 1
    %641 = vsyncpa [#allocation4], 1
    %s642 = scalar_lea.sflag [#allocation4], 1
    %643 = vsyncpa %s642, 1

</llo_original>
